<compile_context>
chip_gen: v5e
topology: v5e:2x2
jax: 0.10.0
libtpu: 0.0.40
codegen_flags: <defaults>
</compile_context>

<pallas_src>
import functools

import jax
import jax.numpy as jnp
from jax.experimental import pallas as pl
from jax.experimental.pallas import tpu as pltpu


def _layernorm2d_kernel(x_ref, w_ref, b_ref, o_ref, *, eps, inv_c):
    # x_ref: (tile_n, C, tile_hw) -- channels on sublanes, spatial on lanes.
    # w_ref / b_ref: (C, 1) float32 (resident, broadcast over batch and lanes).
    x = x_ref[...].astype(jnp.float32)
    # One-pass statistics over the channel axis (cross-sublane VPU reduce).
    mean = jnp.sum(x, axis=1, keepdims=True) * inv_c              # (tn, 1, thw)
    mean_sq = jnp.sum(x * x, axis=1, keepdims=True) * inv_c       # (tn, 1, thw)
    var = jnp.maximum(mean_sq - mean * mean, 0.0)                 # clamp cancellation
    inv_std = jax.lax.rsqrt(var + eps)                            # EUP transcendental
    # y = ((x - mean) * inv_std) * w + b  -> only one full product temp live.
    y = ((x - mean) * inv_std) * w_ref[...] + b_ref[...]
    o_ref[...] = y.astype(o_ref.dtype)


def _tpu_budgets():
    """Generation-aware block-size target and scoped VMEM limit."""
    vmem_cap = 64 * 1024 * 1024  # conservative default (v7x: 64 MiB per TC)
    try:
        vmem_cap = int(pltpu.get_tpu_info().vmem_capacity_bytes)
    except Exception:
        pass
    if vmem_cap >= 96 * 1024 * 1024:
        # v5e / v6e: 128 MiB physical VMEM -> large blocks, generous scoped limit.
        target_block_bytes = 8 * 1024 * 1024
        vmem_limit_bytes = 96 * 1024 * 1024
    else:
        # v7x: 64 MiB physical VMEM -> still-large blocks (fast HBM), tighter limit.
        target_block_bytes = 6 * 1024 * 1024
        vmem_limit_bytes = 52 * 1024 * 1024
    return target_block_bytes, vmem_limit_bytes


def _choose_tiles(n, c, hw, itemsize, target_block_bytes, vmem_limit_bytes):
    """Pick (tile_n, tile_hw) so blocks hit ~target bytes and fit VMEM.

    Per-step VMEM accounting: double-buffered input + output blocks plus ~3 full
    (tile_n, C, tile_hw) f32 temporaries inside the kernel:
        4 * block_bytes + 3 * block_bytes * (4 / itemsize)
    """
    denom = 4.0 + 3.0 * (4.0 / itemsize)
    max_block_bytes = int((vmem_limit_bytes * 0.9) / denom)
    min_block_bytes = 128 * c * itemsize                 # one minimal legal tile
    block_budget = max(min_block_bytes, min(target_block_bytes, max_block_bytes))

    bytes_per_col = c * itemsize                         # one spatial column, all channels
    bytes_per_sample = bytes_per_col * hw

    lanes_budget = max(128, block_budget // max(bytes_per_col, 1))
    if lanes_budget < hw:
        # Large spatial extent: tile the lane (H*W) axis, one sample per step.
        tile_hw = max(128, (lanes_budget // 128) * 128)  # multiple of 128 (layout-legal)
        return 1, int(tile_hw)
    # Whole sample fits in one block: batch samples along N to amortize the
    # ~0.35 us per-grid-step overhead on small C*H*W shapes.
    tile_n = max(1, min(n, block_budget // max(bytes_per_sample, 1)))
    return int(tile_n), hw


def layernorm2d(x, weight, bias, eps=1e-6):
    """x: (N, C, H, W) like the PyTorch module. Returns same shape/dtype."""
    N, C, H, W = x.shape
    HW = H * W
    x3 = x.reshape(N, C, HW)                        # free reshape, no extra HBM pass
    w2 = weight.astype(jnp.float32).reshape(C, 1)   # params resident in f32
    b2 = bias.astype(jnp.float32).reshape(C, 1)

    itemsize = jnp.dtype(x.dtype).itemsize
    target_block_bytes, vmem_limit_bytes = _tpu_budgets()
    tile_n, tile_hw = _choose_tiles(N, C, HW, itemsize,
                                    target_block_bytes, vmem_limit_bytes)

    grid = (pl.cdiv(N, tile_n), pl.cdiv(HW, tile_hw))
    kernel = functools.partial(_layernorm2d_kernel, eps=float(eps), inv_c=1.0 / C)

    out3 = pl.pallas_call(
        kernel,
        out_shape=jax.ShapeDtypeStruct((N, C, HW), x.dtype),
        grid=grid,
        in_specs=[
            pl.BlockSpec((tile_n, C, tile_hw), lambda i, j: (i, 0, j)),
            pl.BlockSpec((C, 1), lambda i, j: (0, 0)),
            pl.BlockSpec((C, 1), lambda i, j: (0, 0)),
        ],
        out_specs=pl.BlockSpec((tile_n, C, tile_hw), lambda i, j: (i, 0, j)),
        compiler_params=pltpu.CompilerParams(
            # Both grid axes are fully independent; "parallel" lets the runtime
            # shard them across v7x's two TensorCores (no-op on 1-TC chips).
            dimension_semantics=("parallel", "parallel"),
            vmem_limit_bytes=vmem_limit_bytes,
        ),
    )(x3, w2, b2)

    return out3.reshape(N, C, H, W)


def layernorm2d_ref(x, weight, bias, eps=1e-6):
    mu = jnp.mean(x, axis=1, keepdims=True)
    var = jnp.mean((x - mu) ** 2, axis=1, keepdims=True)
    y = (x - mu) / jnp.sqrt(var + eps)
    return weight.reshape(1, -1, 1, 1) * y + bias.reshape(1, -1, 1, 1)


if __name__ == "__main__":
    key = jax.random.PRNGKey(0)
    N, C, H, W = 2, 4, 16, 16
    kx, kw, kb = jax.random.split(key, 3)
    x = jax.random.normal(kx, (N, C, H, W), dtype=jnp.float32)
    # Match nn.Parameter init (ones / zeros), with a deterministic perturbation
    # so the scale/shift path is actually exercised.
    weight = jnp.ones((C,), jnp.float32) + 0.1 * jnp.arange(C, dtype=jnp.float32)
    bias = jnp.zeros((C,), jnp.float32) + 0.01 * jnp.arange(C, dtype=jnp.float32)

    out = layernorm2d(x, weight, bias, eps=1e-6)
    out = jax.block_until_ready(out)

    ref = layernorm2d_ref(x, weight, bias, eps=1e-6)
    assert out.shape == (N, C, H, W)
    assert jnp.allclose(out, ref, atol=1e-5, rtol=1e-5), "mismatch vs reference"
    print("KERNEL_OK")
</pallas_src>

<mosaic_0001>
module attributes {stable_mosaic.version = 11 : i64} {
  func.func @_layernorm2d_kernel(%arg0: i32, %arg1: i32, %arg2: memref<2x4x256xf32, #tpu.memory_space<vmem>>, %arg3: memref<4x1xf32, #tpu.memory_space<vmem>>, %arg4: memref<4x1xf32, #tpu.memory_space<vmem>>, %arg5: memref<2x4x256xf32, #tpu.memory_space<vmem>>) attributes {dimension_semantics = [#tpu.dimension_semantics<parallel>, #tpu.dimension_semantics<parallel>], iteration_bounds = array<i64: 1, 1>, scalar_prefetch = 0 : i64, scratch_operands = 0 : i64, tpu.core_type = #tpu.core_type<tc>, window_params = [{transform_indices = @transform_0, window_bounds = array<i64: 2, 4, 256>}, {pipeline_mode = #tpu.pipeline_mode<synchronous>, transform_indices = @transform_1, window_bounds = array<i64: 4, 1>}, {pipeline_mode = #tpu.pipeline_mode<synchronous>, transform_indices = @transform_2, window_bounds = array<i64: 4, 1>}, {transform_indices = @transform_3, window_bounds = array<i64: 2, 4, 256>}]} {
    %c0 = arith.constant 0 : index
    %c0_0 = arith.constant 0 : index
    %c0_1 = arith.constant 0 : index
    %0 = vector.load %arg2[%c0, %c0_0, %c0_1] : memref<2x4x256xf32, #tpu.memory_space<vmem>>, vector<2x4x256xf32>
    %cst = arith.constant dense<0.000000e+00> : vector<2x256xf32>
    %1 = vector.multi_reduction <add>, %0, %cst [1] : vector<2x4x256xf32> to vector<2x256xf32>
    %2 = vector.shape_cast %1 : vector<2x256xf32> to vector<2x1x256xf32>
    %cst_2 = arith.constant 2.500000e-01 : f32
    %3 = vector.broadcast %cst_2 : f32 to vector<2x1x256xf32>
    %4 = arith.mulf %2, %3 : vector<2x1x256xf32>
    %5 = arith.mulf %0, %0 : vector<2x4x256xf32>
    %cst_3 = arith.constant dense<0.000000e+00> : vector<2x256xf32>
    %6 = vector.multi_reduction <add>, %5, %cst_3 [1] : vector<2x4x256xf32> to vector<2x256xf32>
    %7 = vector.shape_cast %6 : vector<2x256xf32> to vector<2x1x256xf32>
    %cst_4 = arith.constant 2.500000e-01 : f32
    %8 = vector.broadcast %cst_4 : f32 to vector<2x1x256xf32>
    %9 = arith.mulf %7, %8 : vector<2x1x256xf32>
    %10 = arith.mulf %4, %4 : vector<2x1x256xf32>
    %11 = arith.subf %9, %10 : vector<2x1x256xf32>
    %cst_5 = arith.constant 0.000000e+00 : f32
    %12 = vector.broadcast %cst_5 : f32 to vector<2x1x256xf32>
    %13 = arith.maximumf %11, %12 : vector<2x1x256xf32>
    %cst_6 = arith.constant 9.99999997E-7 : f32
    %14 = vector.broadcast %cst_6 : f32 to vector<2x1x256xf32>
    %15 = arith.addf %13, %14 : vector<2x1x256xf32>
    %16 = math.rsqrt %15 : vector<2x1x256xf32>
    %17 = vector.broadcast %4 : vector<2x1x256xf32> to vector<2x4x256xf32>
    %18 = arith.subf %0, %17 : vector<2x4x256xf32>
    %19 = vector.broadcast %16 : vector<2x1x256xf32> to vector<2x4x256xf32>
    %20 = arith.mulf %18, %19 : vector<2x4x256xf32>
    %c0_7 = arith.constant 0 : index
    %c0_8 = arith.constant 0 : index
    %21 = vector.load %arg3[%c0_7, %c0_8] : memref<4x1xf32, #tpu.memory_space<vmem>>, vector<4x1xf32>
    %22 = vector.shape_cast %21 : vector<4x1xf32> to vector<1x4x1xf32>
    %23 = vector.broadcast %22 : vector<1x4x1xf32> to vector<2x4x256xf32>
    %24 = arith.mulf %20, %23 : vector<2x4x256xf32>
    %c0_9 = arith.constant 0 : index
    %c0_10 = arith.constant 0 : index
    %25 = vector.load %arg4[%c0_9, %c0_10] : memref<4x1xf32, #tpu.memory_space<vmem>>, vector<4x1xf32>
    %26 = vector.shape_cast %25 : vector<4x1xf32> to vector<1x4x1xf32>
    %27 = vector.broadcast %26 : vector<1x4x1xf32> to vector<2x4x256xf32>
    %28 = arith.addf %24, %27 : vector<2x4x256xf32>
    %c0_11 = arith.constant 0 : index
    %c0_12 = arith.constant 0 : index
    %c0_13 = arith.constant 0 : index
    %29 = vector.load %arg5[%c0_11, %c0_12, %c0_13] : memref<2x4x256xf32, #tpu.memory_space<vmem>>, vector<2x4x256xf32>
    tpu.vector_store %arg5[%c0_11, %c0_12, %c0_13], %28 {strides = array<i32>} : memref<2x4x256xf32, #tpu.memory_space<vmem>>, vector<2x4x256xf32>,
    return
  }
  func.func @transform_0(%arg0: i32, %arg1: i32) -> (i32, i32, i32) {
    %c0_i32 = arith.constant 0 : i32
    %c0_i32_0 = arith.constant 0 : i32
    return %arg0, %c0_i32, %arg1 : i32, i32, i32
  }
  func.func @transform_1(%arg0: i32, %arg1: i32) -> (i32, i32) {
    %c0_i32 = arith.constant 0 : i32
    %c0_i32_0 = arith.constant 0 : i32
    %c0_i32_1 = arith.constant 0 : i32
    return %c0_i32, %c0_i32_0 : i32, i32
  }
  func.func @transform_2(%arg0: i32, %arg1: i32) -> (i32, i32) {
    %c0_i32 = arith.constant 0 : i32
    %c0_i32_0 = arith.constant 0 : i32
    %c0_i32_1 = arith.constant 0 : i32
    return %c0_i32, %c0_i32_0 : i32, i32
  }
  func.func @transform_3(%arg0: i32, %arg1: i32) -> (i32, i32, i32) {
    %c0_i32 = arith.constant 0 : i32
    %c0_i32_0 = arith.constant 0 : i32
    return %arg0, %c0_i32, %arg1 : i32, i32, i32
  }
}

</mosaic_0001>

<llo_original>
// kernel: tpu_custom_call.1
$region0: #{tpu_custom_call.1}
  #allocation0 [shape = 'u32[]', space=smem, size = 0x4, offset = 0x4, fixed_abs, tag = 'smem constant byte address 0x4 - core index']
  #allocation1 [shape = 'u32[72,128]{1,0:T(1,128)}', space=vmem, size = 0x9000, scoped, tag = 'internal scratch']
  %s0 = inlined_call_operand.hbm [shape: f32[2,4,256], index: 0, kind: input, shape index: {}]
  %s1 = inlined_call_operand.vmem [shape: f32[4,1], index: 1, kind: input, shape index: {}]
  %s2 = inlined_call_operand.vmem [shape: f32[4,1], index: 2, kind: input, shape index: {}]
  %s3 = inlined_call_operand.hbm [shape: f32[2,4,256], index: 3, kind: output, shape index: {}]
  %s4 = sld [smem:[#allocation0]]
  $region26: #{tpu_custom_call.1} parent=0
    _
  %s6 = ssub.s32 1, %s4
  %s7 = scalar_select 0, %s6, %s4
  $region1: #{tpu_custom_call.1} parent=0
    #allocation2 [shape = 'u8[8192]{0}', space=vmem, size = 0x2000, scoped, tag = 'input window, operand 0, single buffered']
    #allocation3 [shape = 's32[1]{0}', space=sflag, size = 0x4, scoped, tag = 'scoped memory for tpu_custom_call.1']
    #allocation4 [shape = 's32[1]{0}', space=sflag, size = 0x4, scoped, tag = 'scoped memory for tpu_custom_call.1']
    #allocation5 [shape = 'u8[8192]{0}', space=vmem, size = 0x2000, scoped, tag = 'output window, operand 0, single buffered']
    %8 = vsyncpa [#allocation3], 0
    %9 = vsyncpa [#allocation4], 0
    // Predicated region
    $region2: #{tpu_custom_call.1} parent=1 // pred_check
      _
    $region3: #{tpu_custom_call.1} parent=1 // pred_check_branch
      %11 = sbr.rel (0) target = $region5
    $region4: #{tpu_custom_call.1} parent=1 // pred_region
      %13 = vsyncadd [#allocation3], 0
      %s14 = sshll.u32 %s0, 4
      %s15 = int_to_ptr.hbm [resolvable:$true] %s14
      %s16 = sshll.u32 [#allocation2], 4
      %s17 = int_to_ptr.vmem [resolvable:$true] %s16
      %22 = dma.hbm_to_vmem [thread:$0]  %s15, 256, %s17, [#allocation3], 128, 128, 8
    $region5: #{tpu_custom_call.1} parent=1 // pred_fallthru
      _
    // Predicated region
    $region6: #{tpu_custom_call.1} parent=1 // pred_check
      _
    $region7: #{tpu_custom_call.1} parent=1 // pred_check_branch
      %24 = sbr.rel (0) target = $region9
    $region8: #{tpu_custom_call.1} parent=1 // pred_region
      _
    $region9: #{tpu_custom_call.1} parent=1 // pred_fallthru
      _
    // Predicated region
    $region10: #{tpu_custom_call.1} parent=1 // pred_check
      _
    $region11: #{tpu_custom_call.1} parent=1 // pred_check_branch
      %26 = sbr.rel (0) target = $region13
    $region12: #{tpu_custom_call.1} parent=1 // pred_region
      _
    $region13: #{tpu_custom_call.1} parent=1 // pred_fallthru
      _
    // Predicated region
    $region14: #{tpu_custom_call.1} parent=1 // pred_check
      _
    $region15: #{tpu_custom_call.1} parent=1 // pred_check_branch
      %28 = sbr.rel (0) target = $region17
    $region16: #{tpu_custom_call.1} parent=1 // pred_region
      %30 = dma.done [#allocation3], 256
    $region17: #{tpu_custom_call.1} parent=1 // pred_fallthru
      _
    %v31 = vld [vmem:[#allocation2] sm:$0xff]
    %v32 = vld [vmem:[#allocation2 + $0x8] sm:$0xff]
    %35 = vst [vmem:[#allocation1] ss:$2 sm:$0xff] %v31
    %v36 = vld.sshfl [vmem:[#allocation1] sm:$0xff pattern:$0x75316420]
    %v37 = vld.sshfl [vmem:[#allocation1 + $0x8] sm:$0xff pattern:$0x75316420]
    %s38 = scalar_lea.vmem [#allocation1], 16
    %39 = vst [vmem:[%s38] ss:$2 sm:$0xff] %v32
    %v40 = vld.sshfl [vmem:[#allocation1 + $0x10] sm:$0xff pattern:$0x75316420]
    %v41 = vld.sshfl [vmem:[#allocation1 + $0x18] sm:$0xff pattern:$0x75316420]
    %vm46 = vcmask 1043456
    %v47 = vsel %vm46, %v36, 0.0
    %v48 = vrot.slane %v47, 4
    %v49 = vadd.f32 %v47, %v48
    %v50 = vrot.slane %v49, 2
    %v51 = vadd.f32 %v49, %v50
    %v52 = vrot.slane %v51, 1
    %v53 = vadd.f32 %v51, %v52
    %v54 = vsel %vm46, %v37, 0.0
    %v55 = vrot.slane %v54, 4
    %v56 = vadd.f32 %v54, %v55
    %v57 = vrot.slane %v56, 2
    %v58 = vadd.f32 %v56, %v57
    %v59 = vrot.slane %v58, 1
    %v60 = vadd.f32 %v58, %v59
    %v61 = vsel %vm46, %v40, 0.0
    %v62 = vrot.slane %v61, 4
    %v63 = vadd.f32 %v61, %v62
    %v64 = vrot.slane %v63, 2
    %v65 = vadd.f32 %v63, %v64
    %v66 = vrot.slane %v65, 1
    %v67 = vadd.f32 %v65, %v66
    %v68 = vsel %vm46, %v41, 0.0
    %v69 = vrot.slane %v68, 4
    %v70 = vadd.f32 %v68, %v69
    %v71 = vrot.slane %v70, 2
    %v72 = vadd.f32 %v70, %v71
    %v73 = vrot.slane %v72, 1
    %v74 = vadd.f32 %v72, %v73
    %v75 = vmul.f32 %v53, 0.25
    %v76 = vmul.f32 %v60, 0.25
    %v77 = vmul.f32 %v67, 0.25
    %v78 = vmul.f32 %v74, 0.25
    %v79 = vmul.f32 %v31, %v31
    %v80 = vmul.f32 %v32, %v32
    %83 = vst [vmem:[#allocation1] ss:$2 sm:$0xff] %v79
    %v84 = vld.sshfl [vmem:[#allocation1] sm:$0xff pattern:$0x75316420]
    %v85 = vld.sshfl [vmem:[#allocation1 + $0x8] sm:$0xff pattern:$0x75316420]
    %s86 = scalar_lea.vmem [#allocation1], 16
    %87 = vst [vmem:[%s86] ss:$2 sm:$0xff] %v80
    %v88 = vld.sshfl [vmem:[#allocation1 + $0x10] sm:$0xff pattern:$0x75316420]
    %v89 = vld.sshfl [vmem:[#allocation1 + $0x18] sm:$0xff pattern:$0x75316420]
    %v94 = vsel %vm46, %v84, 0.0
    %v95 = vrot.slane %v94, 4
    %v96 = vadd.f32 %v94, %v95
    %v97 = vrot.slane %v96, 2
    %v98 = vadd.f32 %v96, %v97
    %v99 = vrot.slane %v98, 1
    %v100 = vadd.f32 %v98, %v99
    %v101 = vsel %vm46, %v85, 0.0
    %v102 = vrot.slane %v101, 4
    %v103 = vadd.f32 %v101, %v102
    %v104 = vrot.slane %v103, 2
    %v105 = vadd.f32 %v103, %v104
    %v106 = vrot.slane %v105, 1
    %v107 = vadd.f32 %v105, %v106
    %v108 = vsel %vm46, %v88, 0.0
    %v109 = vrot.slane %v108, 4
    %v110 = vadd.f32 %v108, %v109
    %v111 = vrot.slane %v110, 2
    %v112 = vadd.f32 %v110, %v111
    %v113 = vrot.slane %v112, 1
    %v114 = vadd.f32 %v112, %v113
    %v115 = vsel %vm46, %v89, 0.0
    %v116 = vrot.slane %v115, 4
    %v117 = vadd.f32 %v115, %v116
    %v118 = vrot.slane %v117, 2
    %v119 = vadd.f32 %v117, %v118
    %v120 = vrot.slane %v119, 1
    %v121 = vadd.f32 %v119, %v120
    %v122 = vmul.f32 %v100, 0.25
    %v123 = vmul.f32 %v107, 0.25
    %v124 = vmul.f32 %v114, 0.25
    %v125 = vmul.f32 %v121, 0.25
    %v126 = vmul.f32 %v75, %v75
    %v127 = vmul.f32 %v76, %v76
    %v128 = vmul.f32 %v77, %v77
    %v129 = vmul.f32 %v78, %v78
    %v130 = vsub.f32 %v122, %v126
    %v131 = vsub.f32 %v123, %v127
    %v132 = vsub.f32 %v124, %v128
    %v133 = vsub.f32 %v125, %v129
    %v134 = vmax.f32 %v130, 0.0
    %v135 = vmax.f32 %v131, 0.0
    %v136 = vmax.f32 %v132, 0.0
    %v137 = vmax.f32 %v133, 0.0
    %v138 = vadd.f32 %v134, 1e-06
    %v139 = vadd.f32 %v135, 1e-06
    %v140 = vadd.f32 %v136, 1e-06
    %v141 = vadd.f32 %v137, 1e-06
    %v142 = vrsqrt.pop %v138
    %v143 = vmul.f32 %v142, %v138
    %v144 = vmul.f32 %v143, %v142
    %v145 = vmul.f32 0.5, %v144
    %v146 = vsub.f32 1.5, %v145
    %v147 = vmul.f32 %v142, %v146
    %vm148 = vweird.f32 %v138
    %vm149 = vweird.f32 %v142
    %vm150 = vmor %vm148, %vm149
    %v151 = vsel %vm150, %v142, %v147
    %v152 = vrsqrt.pop %v139
    %v153 = vmul.f32 %v152, %v139
    %v154 = vmul.f32 %v153, %v152
    %v155 = vmul.f32 0.5, %v154
    %v156 = vsub.f32 1.5, %v155
    %v157 = vmul.f32 %v152, %v156
    %vm158 = vweird.f32 %v139
    %vm159 = vweird.f32 %v152
    %vm160 = vmor %vm158, %vm159
    %v161 = vsel %vm160, %v152, %v157
    %v162 = vrsqrt.pop %v140
    %v163 = vmul.f32 %v162, %v140
    %v164 = vmul.f32 %v163, %v162
    %v165 = vmul.f32 0.5, %v164
    %v166 = vsub.f32 1.5, %v165
    %v167 = vmul.f32 %v162, %v166
    %vm168 = vweird.f32 %v140
    %vm169 = vweird.f32 %v162
    %vm170 = vmor %vm168, %vm169
    %v171 = vsel %vm170, %v162, %v167
    %v172 = vrsqrt.pop %v141
    %v173 = vmul.f32 %v172, %v141
    %v174 = vmul.f32 %v173, %v172
    %v175 = vmul.f32 0.5, %v174
    %v176 = vsub.f32 1.5, %v175
    %v177 = vmul.f32 %v172, %v176
    %vm178 = vweird.f32 %v141
    %vm179 = vweird.f32 %v172
    %vm180 = vmor %vm178, %vm179
    %v181 = vsel %vm180, %v172, %v177
    %v186 = vrot.slane %v76, 4
    %v187 = vrot.slane %v78, 4
    %v188 = vsel %vm46, %v75, %v186
    %v189 = vsel %vm46, %v77, %v187
    %v192 = vsub.f32 %v31, %v188
    %v193 = vsub.f32 %v32, %v189
    %v198 = vrot.slane %v161, 4
    %v199 = vrot.slane %v181, 4
    %v200 = vsel %vm46, %v151, %v198
    %v201 = vsel %vm46, %v171, %v199
    %v204 = vmul.f32 %v192, %v200
    %v205 = vmul.f32 %v193, %v201
    %v206 = vld [vmem:[%s1] sm:$0xf]
    %208 = vset.pattern.permute.xlu0 0
    %209 = vperm.xlu0 %208, %v206
    %v210 = vpop.permute.xlu0 %209
    %v212 = vunpack.c.l.s4 839922192
    %v213 = vunpack.c.0.s8 %v212
    %v214 = vperm.slane %v210, %v213
    %v216 = vmul.f32 %v204, %v214
    %v217 = vmul.f32 %v205, %v214
    %v218 = vld [vmem:[%s2] sm:$0xf]
    %220 = vset.pattern.permute.xlu0 0
    %221 = vperm.xlu0 %220, %v218
    %v222 = vpop.permute.xlu0 %221
    %v224 = vunpack.c.l.s4 839922192
    %v225 = vunpack.c.0.s8 %v224
    %v226 = vperm.slane %v222, %v225
    %v228 = vadd.f32 %v216, %v226
    %v229 = vadd.f32 %v217, %v226
    %230 = vst [vmem:[#allocation5] sm:$0xff] %v228
    %231 = vst [vmem:[#allocation5 + $0x8] sm:$0xff] %v229
    // Predicated region
    $region18: #{tpu_custom_call.1} parent=1 // pred_check
      _
    $region19: #{tpu_custom_call.1} parent=1 // pred_check_branch
      %233 = sbr.rel (0) target = $region21
    $region20: #{tpu_custom_call.1} parent=1 // pred_region
      %235 = vsyncadd [#allocation4], 0
      %s236 = sshll.u32 [#allocation5], 4
      %s237 = int_to_ptr.vmem [resolvable:$true] %s236
      %s238 = sshll.u32 %s3, 4
      %s239 = int_to_ptr.hbm [resolvable:$true] %s238
      %244 = dma.vmem_to_hbm [thread:$0]  %s237, 256, %s239, [#allocation4], 128, 128, 8
    $region21: #{tpu_custom_call.1} parent=1 // pred_fallthru
      _
    // Predicated region
    $region22: #{tpu_custom_call.1} parent=1 // pred_check
      _
    $region23: #{tpu_custom_call.1} parent=1 // pred_check_branch
      %246 = sbr.rel (0) target = $region25
    $region24: #{tpu_custom_call.1} parent=1 // pred_region
      %248 = dma.done [#allocation4], 256
    $region25: #{tpu_custom_call.1} parent=1 // pred_fallthru
      _
    %249 = vsyncpa [#allocation3], 1
    %250 = vsyncpa [#allocation4], 1

</llo_original>
